<compile_context>
chip_gen: v5e
topology: v5e:2x2
jax: 0.10.0
libtpu: 0.0.40
codegen_flags: <defaults>
</compile_context>

<pallas_src>
import jax
import jax.numpy as jnp
from jax.experimental import pallas as pl
from jax.experimental.pallas import tpu as pltpu


def _make_kernel(B, Cp, H, W, F, mxu_dtype):
    HW = H * W

    def kernel(x_ref, w_ref, scale_ref, shift_ref, o_ref):
        # x_ref:     (B, Cp, F)     images with 2 zero rows above/below, spatial flattened,
        #                           Cin zero-padded to the sublane granule Cp
        # w_ref:     (Cout, 9*Cp)   conv weights, K ordered (kh, kw, cin)
        # scale_ref: (Cout, 1)      gamma / sqrt(var + eps)
        # shift_ref: (Cout, 1)      beta - mean * scale
        # o_ref:     (B, Cout, HW)  NCHW output with H,W collapsed -> lane-dense stores
        x = x_ref[...]

        # Column masks generated in-kernel (no mask inputs / DMAs).  For kw==0 taps the
        # only reads hitting padded-flat column W-1 are the wrap-around reads of output
        # column 0 (their true contribution is the zero conv padding), so zeroing that
        # column of x once covers all three kw==0 taps; symmetrically for kw==2 / column 0.
        # Hoisted out of the tap loop; masking stays in f32 (v5e-friendly).
        col = jax.lax.broadcasted_iota(jnp.int32, (1, 1, F), 2) % W
        xl = jnp.where(col != (W - 1), x, 0.0)   # source for kw == 0 taps
        xr = jnp.where(col != 0, x, 0.0)         # source for kw == 2 taps
        srcs = (xl, x, xr)

        # im2col without relayout copies: with the padded image flattened at row stride W,
        # tap (kh, kw) is a pure lane shift of (kh+1)*W + (kw-1).  Cp is a whole sublane
        # group, so the sublane concat of the 9 taps needs no repacking, and each per-image
        # lane slab is HW (multiple of 128) wide, so the lane concat is aligned.
        slabs = []
        for kh in range(3):
            for kw in range(3):
                s = (kh + 1) * W + (kw - 1)
                src = srcs[kw]
                pieces = [src[b, :, s:s + HW] for b in range(B)]      # (Cp, HW) each
                slabs.append(pieces[0] if B == 1
                             else jnp.concatenate(pieces, axis=1))    # (Cp, B*HW)
        patches = jnp.concatenate(slabs, axis=0).astype(mxu_dtype)    # (9*Cp, B*HW)

        # Single MXU matmul for the whole batch block (K = 9*Cp), f32 accumulation.
        acc = jnp.dot(w_ref[...], patches,
                      preferred_element_type=jnp.float32)             # (Cout, B*HW)

        # Fused inference BatchNorm + ReLU (f32), then per-image lane-aligned dense stores
        # (slice offsets are multiples of HW = 256).
        y = jnp.maximum(acc * scale_ref[...] + shift_ref[...], 0.0)
        for b in range(B):
            o_ref[b] = y[:, b * HW:(b + 1) * HW].astype(o_ref.dtype)

    return kernel


def ds_conv_forward(x_nchw, weight_oihw, gamma, beta, running_mean, running_var,
                    eps=1e-5, mxu_dtype=None, batch_block=None):
    """ds_conv forward (downsample=False, batchn=True).

    x_nchw: (N, Cin, H, W).  Returns (N, Cout, H, W), same dtype as x.
    mxu_dtype: dtype fed to the MXU. None keeps the input dtype (exact f32 semantics);
      jnp.bfloat16 is recommended on v6e/v7x (f32 accumulation kept, looser tolerance).
    batch_block: images folded per grid step; defaults to min(N, 8).
    """
    N, Cin, H, W = x_nchw.shape
    Cout = weight_oihw.shape[0]
    out_dtype = x_nchw.dtype
    if mxu_dtype is None:
        mxu_dtype = x_nchw.dtype
    mxu_dtype = jnp.dtype(mxu_dtype)

    # Sublane granule of the patches dtype: f32 -> 8, bf16 -> 16, 8-bit -> 32.
    granule = {4: 8, 2: 16, 1: 32}[mxu_dtype.itemsize]
    Cp = -(-Cin // granule) * granule

    if batch_block is None:
        batch_block = min(N, 8)       # on v7x prefer a value leaving >= 2 grid blocks
    B = int(batch_block)
    n_blocks = -(-N // B)
    N_pad = n_blocks * B

    HW = H * W
    F = (H + 4) * W      # 2 zero rows above + 2 below (conv halo + tap-shift slack)

    # ---- wrapper glue: one pad pass over the input (batch / channel / row pad fused) ----
    x_flat = jnp.pad(x_nchw, ((0, N_pad - N), (0, Cp - Cin), (2, 2), (0, 0)))
    x_flat = x_flat.reshape(N_pad, Cp, F)

    # (Cout, Cin, 3, 3) -> (Cout, 9*Cp) with K ordered (kh, kw, cin); zero K-columns for
    # the padded channels.  Hoisted + cast once, not per grid step.
    w_t = jnp.transpose(weight_oihw, (0, 2, 3, 1))                        # (Cout, 3, 3, Cin)
    w_t = jnp.pad(w_t, ((0, 0), (0, 0), (0, 0), (0, Cp - Cin)))
    w_mat = w_t.reshape(Cout, 9 * Cp).astype(mxu_dtype)

    inv_std = 1.0 / jnp.sqrt(running_var.astype(jnp.float32) + eps)
    g32 = gamma.astype(jnp.float32)
    scale = (g32 * inv_std).reshape(Cout, 1)
    shift = (beta.astype(jnp.float32)
             - running_mean.astype(jnp.float32) * g32 * inv_std).reshape(Cout, 1)

    kernel = _make_kernel(B, Cp, H, W, F, mxu_dtype)

    out_flat = pl.pallas_call(
        kernel,
        out_shape=jax.ShapeDtypeStruct((N_pad, Cout, HW), out_dtype),
        grid_spec=pltpu.PrefetchScalarGridSpec(
            num_scalar_prefetch=0,
            grid=(n_blocks,),
            in_specs=[
                pl.BlockSpec((B, Cp, F), lambda n: (n, 0, 0)),
                pl.BlockSpec((Cout, 9 * Cp), lambda n: (0, 0)),
                pl.BlockSpec((Cout, 1), lambda n: (0, 0)),
                pl.BlockSpec((Cout, 1), lambda n: (0, 0)),
            ],
            out_specs=pl.BlockSpec((B, Cout, HW), lambda n: (n, 0, 0)),
        ),
        compiler_params=pltpu.CompilerParams(
            dimension_semantics=("parallel",),
            vmem_limit_bytes=32 * 1024 * 1024),
    )(x_flat, w_mat, scale, shift)

    out = out_flat.reshape(N_pad, Cout, H, W)
    return out[:N] if N_pad != N else out


if __name__ == "__main__":
    # Small shapes consistent with the module: batch=2, in_planes=4, planes=8, 16x16.
    N, Cin, Cout, H, W = 2, 4, 8, 16, 16

    key = jax.random.PRNGKey(0)
    kx, kw, kg, kb, km, kv = jax.random.split(key, 6)

    x = jax.random.normal(kx, (N, Cin, H, W), dtype=jnp.float32)
    # Conv2d(in_planes, planes, 3, stride=1, padding=1, bias=False) -> weight (Cout, Cin, 3, 3)
    weight = jax.random.normal(kw, (Cout, Cin, 3, 3), dtype=jnp.float32) * 0.1
    # BatchNorm2d(planes) parameters / running stats (inference form)
    gamma = 1.0 + 0.1 * jax.random.normal(kg, (Cout,), dtype=jnp.float32)
    beta = 0.1 * jax.random.normal(kb, (Cout,), dtype=jnp.float32)
    running_mean = 0.1 * jax.random.normal(km, (Cout,), dtype=jnp.float32)
    running_var = jnp.abs(1.0 + 0.1 * jax.random.normal(kv, (Cout,), dtype=jnp.float32))

    out = ds_conv_forward(x, weight, gamma, beta, running_mean, running_var)
    jax.block_until_ready(out)

    # sanity: compare against XLA reference conv + BN(eval) + relu
    ref = jax.lax.conv_general_dilated(
        x, weight, window_strides=(1, 1), padding=((1, 1), (1, 1)),
        dimension_numbers=("NCHW", "OIHW", "NCHW"))
    inv_std = 1.0 / jnp.sqrt(running_var + 1e-5)
    ref = ref * (gamma * inv_std).reshape(1, Cout, 1, 1) \
        + (beta - running_mean * gamma * inv_std).reshape(1, Cout, 1, 1)
    ref = jnp.maximum(ref, 0.0)
    assert out.shape == ref.shape
    assert jnp.allclose(out, ref, atol=1e-4, rtol=1e-4), \
        float(jnp.max(jnp.abs(out - ref)))

    print("KERNEL_OK")
</pallas_src>

<mosaic_0001>
module attributes {stable_mosaic.version = 11 : i64} {
  func.func @kernel(%arg0: i32, %arg1: memref<2x8x320xf32, #tpu.memory_space<vmem>>, %arg2: memref<8x72xf32, #tpu.memory_space<vmem>>, %arg3: memref<8x1xf32, #tpu.memory_space<vmem>>, %arg4: memref<8x1xf32, #tpu.memory_space<vmem>>, %arg5: memref<2x8x256xf32, #tpu.memory_space<vmem>>) attributes {dimension_semantics = [#tpu.dimension_semantics<parallel>], iteration_bounds = array<i64: 1>, scalar_prefetch = 0 : i64, scratch_operands = 0 : i64, tpu.core_type = #tpu.core_type<tc>, window_params = [{transform_indices = @transform_0, window_bounds = array<i64: 2, 8, 320>}, {pipeline_mode = #tpu.pipeline_mode<synchronous>, transform_indices = @transform_1, window_bounds = array<i64: 8, 72>}, {pipeline_mode = #tpu.pipeline_mode<synchronous>, transform_indices = @transform_2, window_bounds = array<i64: 8, 1>}, {pipeline_mode = #tpu.pipeline_mode<synchronous>, transform_indices = @transform_3, window_bounds = array<i64: 8, 1>}, {transform_indices = @transform_4, window_bounds = array<i64: 2, 8, 256>}]} {
    %c0 = arith.constant 0 : index
    %c0_0 = arith.constant 0 : index
    %c0_1 = arith.constant 0 : index
    %0 = vector.load %arg1[%c0, %c0_0, %c0_1] : memref<2x8x320xf32, #tpu.memory_space<vmem>>, vector<2x8x320xf32>
    %1 = tpu.iota {dimensions = array<i32: 2>} : vector<1x1x320xi32>
    %c16_i32 = arith.constant 16 : i32
    %c0_i32 = arith.constant 0 : i32
    %2 = arith.cmpi eq, %c16_i32, %c0_i32 : i32
    %c1_i32 = arith.constant 1 : i32
    %3 = arith.select %2, %c1_i32, %c16_i32 : i32
    %4 = vector.broadcast %3 : i32 to vector<1x1x320xi32>
    %5 = arith.remsi %1, %4 : vector<1x1x320xi32>
    %c0_i32_2 = arith.constant 0 : i32
    %6 = vector.broadcast %c0_i32_2 : i32 to vector<1x1x320xi32>
    %7 = arith.cmpi ne, %5, %6 : vector<1x1x320xi32>
    %c0_i32_3 = arith.constant 0 : i32
    %8 = vector.broadcast %c0_i32_3 : i32 to vector<1x1x320xi32>
    %9 = arith.cmpi slt, %5, %8 : vector<1x1x320xi32>
    %c0_i32_4 = arith.constant 0 : i32
    %10 = arith.cmpi slt, %3, %c0_i32_4 : i32
    %11 = vector.broadcast %10 : i1 to vector<1x1x320xi1>
    %12 = vector.broadcast %11 : vector<1x1x320xi1> to vector<1x1x320xi1>
    %13 = arith.xori %9, %12 : vector<1x1x320xi1>
    %14 = arith.andi %13, %7 : vector<1x1x320xi1>
    %15 = vector.broadcast %3 : i32 to vector<1x1x320xi32>
    %16 = arith.addi %5, %15 : vector<1x1x320xi32>
    %17 = arith.select %14, %16, %5 : vector<1x1x320xi1>, vector<1x1x320xi32>
    %c15_i32 = arith.constant 15 : i32
    %18 = vector.broadcast %c15_i32 : i32 to vector<1x1x320xi32>
    %19 = arith.cmpi ne, %17, %18 : vector<1x1x320xi32>
    %cst = arith.constant 0.000000e+00 : f32
    %20 = vector.shape_cast %19 : vector<1x1x320xi1> to vector<1x1x320xi1>
    %21 = vector.broadcast %20 : vector<1x1x320xi1> to vector<2x8x320xi1>
    %22 = vector.broadcast %cst : f32 to vector<2x8x320xf32>
    %23 = arith.select %21, %0, %22 : vector<2x8x320xi1>, vector<2x8x320xf32>
    %c0_i32_5 = arith.constant 0 : i32
    %24 = vector.broadcast %c0_i32_5 : i32 to vector<1x1x320xi32>
    %25 = arith.cmpi ne, %17, %24 : vector<1x1x320xi32>
    %cst_6 = arith.constant 0.000000e+00 : f32
    %26 = vector.shape_cast %25 : vector<1x1x320xi1> to vector<1x1x320xi1>
    %27 = vector.broadcast %26 : vector<1x1x320xi1> to vector<2x8x320xi1>
    %28 = vector.broadcast %cst_6 : f32 to vector<2x8x320xf32>
    %29 = arith.select %27, %0, %28 : vector<2x8x320xi1>, vector<2x8x320xf32>
    %30 = vector.extract_strided_slice %23 {offsets = [0, 0, 15], sizes = [1, 8, 256], strides = [1, 1, 1]} : vector<2x8x320xf32> to vector<1x8x256xf32>
    %31 = vector.shape_cast %30 : vector<1x8x256xf32> to vector<8x256xf32>
    %32 = vector.extract_strided_slice %23 {offsets = [1, 0, 15], sizes = [1, 8, 256], strides = [1, 1, 1]} : vector<2x8x320xf32> to vector<1x8x256xf32>
    %33 = vector.shape_cast %32 : vector<1x8x256xf32> to vector<8x256xf32>
    %34 = tpu.concatenate %31, %33 in 1 : vector<8x256xf32>, vector<8x256xf32> -> vector<8x512xf32>
    %35 = vector.extract_strided_slice %0 {offsets = [0, 0, 16], sizes = [1, 8, 256], strides = [1, 1, 1]} : vector<2x8x320xf32> to vector<1x8x256xf32>
    %36 = vector.shape_cast %35 : vector<1x8x256xf32> to vector<8x256xf32>
    %37 = vector.extract_strided_slice %0 {offsets = [1, 0, 16], sizes = [1, 8, 256], strides = [1, 1, 1]} : vector<2x8x320xf32> to vector<1x8x256xf32>
    %38 = vector.shape_cast %37 : vector<1x8x256xf32> to vector<8x256xf32>
    %39 = tpu.concatenate %36, %38 in 1 : vector<8x256xf32>, vector<8x256xf32> -> vector<8x512xf32>
    %40 = vector.extract_strided_slice %29 {offsets = [0, 0, 17], sizes = [1, 8, 256], strides = [1, 1, 1]} : vector<2x8x320xf32> to vector<1x8x256xf32>
    %41 = vector.shape_cast %40 : vector<1x8x256xf32> to vector<8x256xf32>
    %42 = vector.extract_strided_slice %29 {offsets = [1, 0, 17], sizes = [1, 8, 256], strides = [1, 1, 1]} : vector<2x8x320xf32> to vector<1x8x256xf32>
    %43 = vector.shape_cast %42 : vector<1x8x256xf32> to vector<8x256xf32>
    %44 = tpu.concatenate %41, %43 in 1 : vector<8x256xf32>, vector<8x256xf32> -> vector<8x512xf32>
    %45 = vector.extract_strided_slice %23 {offsets = [0, 0, 31], sizes = [1, 8, 256], strides = [1, 1, 1]} : vector<2x8x320xf32> to vector<1x8x256xf32>
    %46 = vector.shape_cast %45 : vector<1x8x256xf32> to vector<8x256xf32>
    %47 = vector.extract_strided_slice %23 {offsets = [1, 0, 31], sizes = [1, 8, 256], strides = [1, 1, 1]} : vector<2x8x320xf32> to vector<1x8x256xf32>
    %48 = vector.shape_cast %47 : vector<1x8x256xf32> to vector<8x256xf32>
    %49 = tpu.concatenate %46, %48 in 1 : vector<8x256xf32>, vector<8x256xf32> -> vector<8x512xf32>
    %50 = vector.extract_strided_slice %0 {offsets = [0, 0, 32], sizes = [1, 8, 256], strides = [1, 1, 1]} : vector<2x8x320xf32> to vector<1x8x256xf32>
    %51 = vector.shape_cast %50 : vector<1x8x256xf32> to vector<8x256xf32>
    %52 = vector.extract_strided_slice %0 {offsets = [1, 0, 32], sizes = [1, 8, 256], strides = [1, 1, 1]} : vector<2x8x320xf32> to vector<1x8x256xf32>
    %53 = vector.shape_cast %52 : vector<1x8x256xf32> to vector<8x256xf32>
    %54 = tpu.concatenate %51, %53 in 1 : vector<8x256xf32>, vector<8x256xf32> -> vector<8x512xf32>
    %55 = vector.extract_strided_slice %29 {offsets = [0, 0, 33], sizes = [1, 8, 256], strides = [1, 1, 1]} : vector<2x8x320xf32> to vector<1x8x256xf32>
    %56 = vector.shape_cast %55 : vector<1x8x256xf32> to vector<8x256xf32>
    %57 = vector.extract_strided_slice %29 {offsets = [1, 0, 33], sizes = [1, 8, 256], strides = [1, 1, 1]} : vector<2x8x320xf32> to vector<1x8x256xf32>
    %58 = vector.shape_cast %57 : vector<1x8x256xf32> to vector<8x256xf32>
    %59 = tpu.concatenate %56, %58 in 1 : vector<8x256xf32>, vector<8x256xf32> -> vector<8x512xf32>
    %60 = vector.extract_strided_slice %23 {offsets = [0, 0, 47], sizes = [1, 8, 256], strides = [1, 1, 1]} : vector<2x8x320xf32> to vector<1x8x256xf32>
    %61 = vector.shape_cast %60 : vector<1x8x256xf32> to vector<8x256xf32>
    %62 = vector.extract_strided_slice %23 {offsets = [1, 0, 47], sizes = [1, 8, 256], strides = [1, 1, 1]} : vector<2x8x320xf32> to vector<1x8x256xf32>
    %63 = vector.shape_cast %62 : vector<1x8x256xf32> to vector<8x256xf32>
    %64 = tpu.concatenate %61, %63 in 1 : vector<8x256xf32>, vector<8x256xf32> -> vector<8x512xf32>
    %65 = vector.extract_strided_slice %0 {offsets = [0, 0, 48], sizes = [1, 8, 256], strides = [1, 1, 1]} : vector<2x8x320xf32> to vector<1x8x256xf32>
    %66 = vector.shape_cast %65 : vector<1x8x256xf32> to vector<8x256xf32>
    %67 = vector.extract_strided_slice %0 {offsets = [1, 0, 48], sizes = [1, 8, 256], strides = [1, 1, 1]} : vector<2x8x320xf32> to vector<1x8x256xf32>
    %68 = vector.shape_cast %67 : vector<1x8x256xf32> to vector<8x256xf32>
    %69 = tpu.concatenate %66, %68 in 1 : vector<8x256xf32>, vector<8x256xf32> -> vector<8x512xf32>
    %70 = vector.extract_strided_slice %29 {offsets = [0, 0, 49], sizes = [1, 8, 256], strides = [1, 1, 1]} : vector<2x8x320xf32> to vector<1x8x256xf32>
    %71 = vector.shape_cast %70 : vector<1x8x256xf32> to vector<8x256xf32>
    %72 = vector.extract_strided_slice %29 {offsets = [1, 0, 49], sizes = [1, 8, 256], strides = [1, 1, 1]} : vector<2x8x320xf32> to vector<1x8x256xf32>
    %73 = vector.shape_cast %72 : vector<1x8x256xf32> to vector<8x256xf32>
    %74 = tpu.concatenate %71, %73 in 1 : vector<8x256xf32>, vector<8x256xf32> -> vector<8x512xf32>
    %75 = tpu.concatenate %34, %39, %44, %49, %54, %59, %64, %69, %74 in 0 : vector<8x512xf32>, vector<8x512xf32>, vector<8x512xf32>, vector<8x512xf32>, vector<8x512xf32>, vector<8x512xf32>, vector<8x512xf32>, vector<8x512xf32>, vector<8x512xf32> -> vector<72x512xf32>
    %c0_7 = arith.constant 0 : index
    %c0_8 = arith.constant 0 : index
    %76 = vector.load %arg2[%c0_7, %c0_8] : memref<8x72xf32, #tpu.memory_space<vmem>>, vector<8x72xf32>
    %cst_9 = arith.constant dense<0.000000e+00> : vector<8x512xf32>
    %77 = tpu.matmul %76, %75, %cst_9 {dimension_numbers = #tpu.dot_dimension_numbers<[1], [0], [0], [1], [0, 0, 1, 1], [], []>} : vector<8x72xf32>, vector<72x512xf32>, vector<8x512xf32> -> vector<8x512xf32>
    %c0_10 = arith.constant 0 : index
    %c0_11 = arith.constant 0 : index
    %78 = vector.load %arg3[%c0_10, %c0_11] : memref<8x1xf32, #tpu.memory_space<vmem>>, vector<8x1xf32>
    %79 = vector.broadcast %78 : vector<8x1xf32> to vector<8x512xf32>
    %80 = arith.mulf %77, %79 : vector<8x512xf32>
    %c0_12 = arith.constant 0 : index
    %c0_13 = arith.constant 0 : index
    %81 = vector.load %arg4[%c0_12, %c0_13] : memref<8x1xf32, #tpu.memory_space<vmem>>, vector<8x1xf32>
    %82 = vector.broadcast %81 : vector<8x1xf32> to vector<8x512xf32>
    %83 = arith.addf %80, %82 : vector<8x512xf32>
    %cst_14 = arith.constant 0.000000e+00 : f32
    %84 = vector.broadcast %cst_14 : f32 to vector<8x512xf32>
    %85 = arith.maximumf %83, %84 : vector<8x512xf32>
    %86 = vector.extract_strided_slice %85 {offsets = [0, 0], sizes = [8, 256], strides = [1, 1]} : vector<8x512xf32> to vector<8x256xf32>
    %c0_15 = arith.constant 0 : index
    %c0_16 = arith.constant 0 : index
    %c0_17 = arith.constant 0 : index
    %87 = vector.load %arg5[%c0_15, %c0_16, %c0_17] : memref<2x8x256xf32, #tpu.memory_space<vmem>>, vector<1x8x256xf32>
    %88 = vector.shape_cast %87 : vector<1x8x256xf32> to vector<8x256xf32>
    %89 = vector.shape_cast %86 : vector<8x256xf32> to vector<1x8x256xf32>
    tpu.vector_store %arg5[%c0_15, %c0_16, %c0_17], %89 {strides = array<i32>} : memref<2x8x256xf32, #tpu.memory_space<vmem>>, vector<1x8x256xf32>,
    %90 = vector.extract_strided_slice %85 {offsets = [0, 256], sizes = [8, 256], strides = [1, 1]} : vector<8x512xf32> to vector<8x256xf32>
    %c1 = arith.constant 1 : index
    %c0_18 = arith.constant 0 : index
    %c0_19 = arith.constant 0 : index
    %91 = vector.load %arg5[%c1, %c0_18, %c0_19] : memref<2x8x256xf32, #tpu.memory_space<vmem>>, vector<1x8x256xf32>
    %92 = vector.shape_cast %91 : vector<1x8x256xf32> to vector<8x256xf32>
    %93 = vector.shape_cast %90 : vector<8x256xf32> to vector<1x8x256xf32>
    tpu.vector_store %arg5[%c1, %c0_18, %c0_19], %93 {strides = array<i32>} : memref<2x8x256xf32, #tpu.memory_space<vmem>>, vector<1x8x256xf32>,
    return
  }
  func.func @transform_0(%arg0: i32) -> (i32, i32, i32) {
    %c0_i32 = arith.constant 0 : i32
    %c0_i32_0 = arith.constant 0 : i32
    %c0_i32_1 = arith.constant 0 : i32
    return %arg0, %c0_i32, %c0_i32_0 : i32, i32, i32
  }
  func.func @transform_1(%arg0: i32) -> (i32, i32) {
    %c0_i32 = arith.constant 0 : i32
    %c0_i32_0 = arith.constant 0 : i32
    %c0_i32_1 = arith.constant 0 : i32
    return %c0_i32, %c0_i32_0 : i32, i32
  }
  func.func @transform_2(%arg0: i32) -> (i32, i32) {
    %c0_i32 = arith.constant 0 : i32
    %c0_i32_0 = arith.constant 0 : i32
    %c0_i32_1 = arith.constant 0 : i32
    return %c0_i32, %c0_i32_0 : i32, i32
  }
  func.func @transform_3(%arg0: i32) -> (i32, i32) {
    %c0_i32 = arith.constant 0 : i32
    %c0_i32_0 = arith.constant 0 : i32
    %c0_i32_1 = arith.constant 0 : i32
    return %c0_i32, %c0_i32_0 : i32, i32
  }
  func.func @transform_4(%arg0: i32) -> (i32, i32, i32) {
    %c0_i32 = arith.constant 0 : i32
    %c0_i32_0 = arith.constant 0 : i32
    %c0_i32_1 = arith.constant 0 : i32
    return %arg0, %c0_i32, %c0_i32_0 : i32, i32, i32
  }
}

</mosaic_0001>

<llo_original>
// kernel: tpu_custom_call.1
$region0: #{tpu_custom_call.1}
  #allocation0 [shape = 'u32[]', space=smem, size = 0x4, offset = 0x4, fixed_abs, tag = 'smem constant byte address 0x4 - core index']
  #allocation1 [shape = 'u32[72,128]{1,0:T(1,128)}', space=vmem, size = 0x9000, scoped, tag = 'internal scratch']
  %s0 = inlined_call_operand.hbm [shape: f32[2,8,320], index: 0, kind: input, shape index: {}]
  %s1 = inlined_call_operand.vmem [shape: f32[8,72], index: 1, kind: input, shape index: {}]
  %s2 = inlined_call_operand.vmem [shape: f32[8,1], index: 2, kind: input, shape index: {}]
  %s3 = inlined_call_operand.vmem [shape: f32[8,1], index: 3, kind: input, shape index: {}]
  %s4 = inlined_call_operand.hbm [shape: f32[2,8,256], index: 4, kind: output, shape index: {}]
  %s5 = sld [smem:[#allocation0]]
  $region30: #{tpu_custom_call.1} parent=0
    _
  %s7 = ssub.s32 1, %s5
  %s8 = scalar_select 0, %s7, %s5
  $region1: #{tpu_custom_call.1} parent=0
    #allocation2 [shape = 'u8[24576]{0}', space=vmem, size = 0x6000, scoped, tag = 'input window, operand 0, single buffered']
    #allocation3 [shape = 's32[1]{0}', space=sflag, size = 0x4, scoped, tag = 'scoped memory for tpu_custom_call.1']
    #allocation4 [shape = 's32[1]{0}', space=sflag, size = 0x4, scoped, tag = 'scoped memory for tpu_custom_call.1']
    #allocation5 [shape = 'u8[16384]{0}', space=vmem, size = 0x4000, scoped, tag = 'output window, operand 0, single buffered']
    %9 = vsyncpa [#allocation3], 0
    %10 = vsyncpa [#allocation4], 0
    // Predicated region
    $region2: #{tpu_custom_call.1} parent=1 // pred_check
      _
    $region3: #{tpu_custom_call.1} parent=1 // pred_check_branch
      %12 = sbr.rel (0) target = $region5
    $region4: #{tpu_custom_call.1} parent=1 // pred_region
      %14 = vsyncadd [#allocation3], 0
      %s15 = sshll.u32 %s0, 4
      %s16 = int_to_ptr.hbm [resolvable:$true] %s15
      %s17 = sshll.u32 [#allocation2], 4
      %s18 = int_to_ptr.vmem [resolvable:$true] %s17
      %23 = dma.hbm_to_vmem [thread:$0]  %s16, 768, %s18, [#allocation3], 384, 384, 24
    $region5: #{tpu_custom_call.1} parent=1 // pred_fallthru
      _
    // Predicated region
    $region6: #{tpu_custom_call.1} parent=1 // pred_check
      _
    $region7: #{tpu_custom_call.1} parent=1 // pred_check_branch
      %25 = sbr.rel (0) target = $region9
    $region8: #{tpu_custom_call.1} parent=1 // pred_region
      _
    $region9: #{tpu_custom_call.1} parent=1 // pred_fallthru
      _
    // Predicated region
    $region10: #{tpu_custom_call.1} parent=1 // pred_check
      _
    $region11: #{tpu_custom_call.1} parent=1 // pred_check_branch
      %27 = sbr.rel (0) target = $region13
    $region12: #{tpu_custom_call.1} parent=1 // pred_region
      _
    $region13: #{tpu_custom_call.1} parent=1 // pred_fallthru
      _
    // Predicated region
    $region14: #{tpu_custom_call.1} parent=1 // pred_check
      _
    $region15: #{tpu_custom_call.1} parent=1 // pred_check_branch
      %29 = sbr.rel (0) target = $region17
    $region16: #{tpu_custom_call.1} parent=1 // pred_region
      _
    $region17: #{tpu_custom_call.1} parent=1 // pred_fallthru
      _
    // Predicated region
    $region18: #{tpu_custom_call.1} parent=1 // pred_check
      _
    $region19: #{tpu_custom_call.1} parent=1 // pred_check_branch
      %31 = sbr.rel (0) target = $region21
    $region20: #{tpu_custom_call.1} parent=1 // pred_region
      %33 = dma.done [#allocation3], 768
    $region21: #{tpu_custom_call.1} parent=1 // pred_fallthru
      _
    %v34 = vld [vmem:[#allocation2] sm:$0xff]
    %v35 = vld [vmem:[#allocation2 + $0x8] sm:$0xff]
    %v36 = vld [vmem:[#allocation2 + $0x10] sm:$0xff]
    %v37 = vld [vmem:[#allocation2 + $0x18] sm:$0xff]
    %v38 = vld [vmem:[#allocation2 + $0x20] sm:$0xff]
    %v39 = vld [vmem:[#allocation2 + $0x28] sm:$0xff]
    %v40 = vlaneseq
    %v41 = vand.u32 %v40, 127
    %v42 = vadd.s32 %v41, 128
    %v43 = vadd.s32 %v41, 256
    %vm44 = vcmp.lt.s32.totalorder %v41, 0
    %v45 = vsub.s32 0, %v41
    %v46 = vsel %vm44, %v45, %v41
    %v47 = vshrl.u32 %v46, 4
    %v48 = vand.u32 %v46, 15
    %v49 = vsub.s32 0, %v48
    %v50 = vsel %vm44, %v49, %v48
    %vm51 = vcmp.lt.s32.totalorder %v42, 0
    %v52 = vsub.s32 0, %v42
    %v53 = vsel %vm51, %v52, %v42
    %v54 = vshrl.u32 %v53, 4
    %v55 = vand.u32 %v53, 15
    %v56 = vsub.s32 0, %v55
    %v57 = vsel %vm51, %v56, %v55
    %vm58 = vcmp.lt.s32.totalorder %v43, 0
    %v59 = vsub.s32 0, %v43
    %v60 = vsel %vm58, %v59, %v43
    %v61 = vshrl.u32 %v60, 4
    %v62 = vand.u32 %v60, 15
    %v63 = vsub.s32 0, %v62
    %v64 = vsel %vm58, %v63, %v62
    %vm65 = vcmp.ne.s32.totalorder %v50, 0
    %vm66 = vcmp.ne.s32.totalorder %v57, 0
    %vm67 = vcmp.ne.s32.totalorder %v64, 0
    %vm68 = vcmp.lt.s32.totalorder %v50, 0
    %vm69 = vcmp.lt.s32.totalorder %v57, 0
    %vm70 = vcmp.lt.s32.totalorder %v64, 0
    %vm71 = vmand %vm68, %vm65
    %vm72 = vmand %vm69, %vm66
    %vm73 = vmand %vm70, %vm67
    %v74 = vadd.s32 %v50, 16
    %v75 = vadd.s32 %v57, 16
    %v76 = vadd.s32 %v64, 16
    %v77 = vsel %vm71, %v74, %v50
    %v78 = vsel %vm72, %v75, %v57
    %v79 = vsel %vm73, %v76, %v64
    %vm80 = vcmp.ne.s32.totalorder %v77, 15
    %vm81 = vcmp.ne.s32.totalorder %v78, 15
    %vm82 = vcmp.ne.s32.totalorder %v79, 15
    %v83 = vsel %vm80, 1, 0
    %v84 = vsel %vm81, 1, 0
    %v85 = vsel %vm82, 1, 0
    %vm86 = vcmp.eq.s32.totalorder %v83, 1
    %vm87 = vcmp.eq.s32.totalorder %v84, 1
    %vm88 = vcmp.eq.s32.totalorder %v85, 1
    %v89 = vsel %vm86, %v34, 0.0
    %v90 = vsel %vm87, %v35, 0.0
    %v91 = vsel %vm88, %v36, 0.0
    %v92 = vsel %vm86, %v37, 0.0
    %v93 = vsel %vm87, %v38, 0.0
    %v94 = vsel %vm88, %v39, 0.0
    %vm95 = vcmp.ne.s32.totalorder %v77, 0
    %vm96 = vcmp.ne.s32.totalorder %v78, 0
    %vm97 = vcmp.ne.s32.totalorder %v79, 0
    %v98 = vsel %vm95, 1, 0
    %v99 = vsel %vm96, 1, 0
    %v100 = vsel %vm97, 1, 0
    %vm101 = vcmp.eq.s32.totalorder %v98, 1
    %vm102 = vcmp.eq.s32.totalorder %v99, 1
    %vm103 = vcmp.eq.s32.totalorder %v100, 1
    %v104 = vsel %vm101, %v34, 0.0
    %v105 = vsel %vm102, %v35, 0.0
    %v106 = vsel %vm103, %v36, 0.0
    %v107 = vsel %vm101, %v37, 0.0
    %v108 = vsel %vm102, %v38, 0.0
    %v109 = vsel %vm103, %v39, 0.0
    %113 = vrot.lane.b32.xlu0 %v89, 113
    %v114 = vpop.permute.xlu0 %113
    %115 = vrot.lane.b32.xlu0 %v90, 113
    %v116 = vpop.permute.xlu0 %115
    %117 = vrot.lane.b32.xlu0 %v91, 113
    %v118 = vpop.permute.xlu0 %117
    %vm119 = vcmask 924672
    %v120 = vsel %vm119, %v114, %v116
    %v121 = vsel %vm119, %v116, %v118
    %127 = vrot.lane.b32.xlu0 %v92, 113
    %v128 = vpop.permute.xlu0 %127
    %129 = vrot.lane.b32.xlu0 %v93, 113
    %v130 = vpop.permute.xlu0 %129
    %131 = vrot.lane.b32.xlu0 %v94, 113
    %v132 = vpop.permute.xlu0 %131
    %v133 = vsel %vm119, %v128, %v130
    %v134 = vsel %vm119, %v130, %v132
    %140 = vrot.lane.b32.xlu0 %v34, 112
    %v141 = vpop.permute.xlu0 %140
    %142 = vrot.lane.b32.xlu0 %v35, 112
    %v143 = vpop.permute.xlu0 %142
    %144 = vrot.lane.b32.xlu0 %v36, 112
    %v145 = vpop.permute.xlu0 %144
    %vm146 = vcmask 916480
    %v147 = vsel %vm146, %v141, %v143
    %v148 = vsel %vm146, %v143, %v145
    %154 = vrot.lane.b32.xlu0 %v37, 112
    %v155 = vpop.permute.xlu0 %154
    %156 = vrot.lane.b32.xlu0 %v38, 112
    %v157 = vpop.permute.xlu0 %156
    %158 = vrot.lane.b32.xlu0 %v39, 112
    %v159 = vpop.permute.xlu0 %158
    %v160 = vsel %vm146, %v155, %v157
    %v161 = vsel %vm146, %v157, %v159
    %167 = vrot.lane.b32.xlu0 %v104, 111
    %v168 = vpop.permute.xlu0 %167
    %169 = vrot.lane.b32.xlu0 %v105, 111
    %v170 = vpop.permute.xlu0 %169
    %171 = vrot.lane.b32.xlu0 %v106, 111
    %v172 = vpop.permute.xlu0 %171
    %vm173 = vcmask 908288
    %v174 = vsel %vm173, %v168, %v170
    %v175 = vsel %vm173, %v170, %v172
    %181 = vrot.lane.b32.xlu0 %v107, 111
    %v182 = vpop.permute.xlu0 %181
    %183 = vrot.lane.b32.xlu0 %v108, 111
    %v184 = vpop.permute.xlu0 %183
    %185 = vrot.lane.b32.xlu0 %v109, 111
    %v186 = vpop.permute.xlu0 %185
    %v187 = vsel %vm173, %v182, %v184
    %v188 = vsel %vm173, %v184, %v186
    %191 = vrot.lane.b32.xlu0 %v89, 97
    %v192 = vpop.permute.xlu0 %191
    %193 = vrot.lane.b32.xlu0 %v90, 97
    %v194 = vpop.permute.xlu0 %193
    %195 = vrot.lane.b32.xlu0 %v91, 97
    %v196 = vpop.permute.xlu0 %195
    %vm197 = vcmask 793600
    %v198 = vsel %vm197, %v192, %v194
    %v199 = vsel %vm197, %v194, %v196
    %202 = vrot.lane.b32.xlu0 %v92, 97
    %v203 = vpop.permute.xlu0 %202
    %204 = vrot.lane.b32.xlu0 %v93, 97
    %v205 = vpop.permute.xlu0 %204
    %206 = vrot.lane.b32.xlu0 %v94, 97
    %v207 = vpop.permute.xlu0 %206
    %v208 = vsel %vm197, %v203, %v205
    %v209 = vsel %vm197, %v205, %v207
    %212 = vrot.lane.b32.xlu0 %v34, 96
    %v213 = vpop.permute.xlu0 %212
    %214 = vrot.lane.b32.xlu0 %v35, 96
    %v215 = vpop.permute.xlu0 %214
    %216 = vrot.lane.b32.xlu0 %v36, 96
    %v217 = vpop.permute.xlu0 %216
    %vm218 = vcmask 785408
    %v219 = vsel %vm218, %v213, %v215
    %v220 = vsel %vm218, %v215, %v217
    %223 = vrot.lane.b32.xlu0 %v37, 96
    %v224 = vpop.permute.xlu0 %223
    %225 = vrot.lane.b32.xlu0 %v38, 96
    %v226 = vpop.permute.xlu0 %225
    %227 = vrot.lane.b32.xlu0 %v39, 96
    %v228 = vpop.permute.xlu0 %227
    %v229 = vsel %vm218, %v224, %v226
    %v230 = vsel %vm218, %v226, %v228
    %233 = vrot.lane.b32.xlu0 %v104, 95
    %v234 = vpop.permute.xlu0 %233
    %235 = vrot.lane.b32.xlu0 %v105, 95
    %v236 = vpop.permute.xlu0 %235
    %237 = vrot.lane.b32.xlu0 %v106, 95
    %v238 = vpop.permute.xlu0 %237
    %vm239 = vcmask 777216
    %v240 = vsel %vm239, %v234, %v236
    %v241 = vsel %vm239, %v236, %v238
    %244 = vrot.lane.b32.xlu0 %v107, 95
    %v245 = vpop.permute.xlu0 %244
    %246 = vrot.lane.b32.xlu0 %v108, 95
    %v247 = vpop.permute.xlu0 %246
    %248 = vrot.lane.b32.xlu0 %v109, 95
    %v249 = vpop.permute.xlu0 %248
    %v250 = vsel %vm239, %v245, %v247
    %v251 = vsel %vm239, %v247, %v249
    %254 = vrot.lane.b32.xlu0 %v89, 81
    %v255 = vpop.permute.xlu0 %254
    %256 = vrot.lane.b32.xlu0 %v90, 81
    %v257 = vpop.permute.xlu0 %256
    %258 = vrot.lane.b32.xlu0 %v91, 81
    %v259 = vpop.permute.xlu0 %258
    %vm260 = vcmask 662528
    %v261 = vsel %vm260, %v255, %v257
    %v262 = vsel %vm260, %v257, %v259
    %265 = vrot.lane.b32.xlu0 %v92, 81
    %v266 = vpop.permute.xlu0 %265
    %267 = vrot.lane.b32.xlu0 %v93, 81
    %v268 = vpop.permute.xlu0 %267
    %269 = vrot.lane.b32.xlu0 %v94, 81
    %v270 = vpop.permute.xlu0 %269
    %v271 = vsel %vm260, %v266, %v268
    %v272 = vsel %vm260, %v268, %v270
    %275 = vrot.lane.b32.xlu0 %v34, 80
    %v276 = vpop.permute.xlu0 %275
    %277 = vrot.lane.b32.xlu0 %v35, 80
    %v278 = vpop.permute.xlu0 %277
    %279 = vrot.lane.b32.xlu0 %v36, 80
    %v280 = vpop.permute.xlu0 %279
    %vm281 = vcmask 654336
    %v282 = vsel %vm281, %v276, %v278
    %v283 = vsel %vm281, %v278, %v280
    %286 = vrot.lane.b32.xlu0 %v37, 80
    %v287 = vpop.permute.xlu0 %286
    %288 = vrot.lane.b32.xlu0 %v38, 80
    %v289 = vpop.permute.xlu0 %288
    %290 = vrot.lane.b32.xlu0 %v39, 80
    %v291 = vpop.permute.xlu0 %290
    %v292 = vsel %vm281, %v287, %v289
    %v293 = vsel %vm281, %v289, %v291
    %296 = vrot.lane.b32.xlu0 %v104, 79
    %v297 = vpop.permute.xlu0 %296
    %298 = vrot.lane.b32.xlu0 %v105, 79
    %v299 = vpop.permute.xlu0 %298
    %300 = vrot.lane.b32.xlu0 %v106, 79
    %v301 = vpop.permute.xlu0 %300
    %vm302 = vcmask 646144
    %v303 = vsel %vm302, %v297, %v299
    %v304 = vsel %vm302, %v299, %v301
    %307 = vrot.lane.b32.xlu0 %v107, 79
    %v308 = vpop.permute.xlu0 %307
    %309 = vrot.lane.b32.xlu0 %v108, 79
    %v310 = vpop.permute.xlu0 %309
    %311 = vrot.lane.b32.xlu0 %v109, 79
    %v312 = vpop.permute.xlu0 %311
    %v313 = vsel %vm302, %v308, %v310
    %v314 = vsel %vm302, %v310, %v312
    %v317 = vld [vmem:[%s1] sm:$0xff]
    %vm318 = vcmask 588800
    %v320 = vsel %vm318, %v317, 0
    %322 = vmatpush.msra.mxu0 0.0
    %323 = vmatpush.msra.mxu0 0.0
    %324 = vmatpush.msra.mxu0 0.0
    %325 = vmatpush.msra.mxu0 0.0
    %326 = vmatpush.msra.mxu0 0.0
    %327 = vmatpush.msra.mxu0 0.0
    %328 = vmatpush.msra.mxu0 0.0
    %329 = vmatpush.msra.mxu0 %v303
    %330 = vmatpush.msra.mxu0 %v282
    %331 = vmatpush.msra.mxu0 %v261
    %332 = vmatpush.msra.mxu0 %v240
    %333 = vmatpush.msra.mxu0 %v219
    %334 = vmatpush.msra.mxu0 %v198
    %335 = vmatpush.msra.mxu0 %v174
    %336 = vmatpush.msra.mxu0 %v147
    %337 = vmatpush.msra.mxu0 %v120
    %338 = vmatmul.f32.gmra.mxu0 %v320
    %v339 = vpop.f32.mrf.mxu0
    %v340 = vadd.f32 0.0, %v339
    %341 = vdwg.mxu0
    %342 = vmatpush.msra.mxu0 0.0
    %343 = vmatpush.msra.mxu0 0.0
    %344 = vmatpush.msra.mxu0 0.0
    %345 = vmatpush.msra.mxu0 0.0
    %346 = vmatpush.msra.mxu0 0.0
    %347 = vmatpush.msra.mxu0 0.0
    %348 = vmatpush.msra.mxu0 0.0
    %349 = vmatpush.msra.mxu0 %v304
    %350 = vmatpush.msra.mxu0 %v283
    %351 = vmatpush.msra.mxu0 %v262
    %352 = vmatpush.msra.mxu0 %v241
    %353 = vmatpush.msra.mxu0 %v220
    %354 = vmatpush.msra.mxu0 %v199
    %355 = vmatpush.msra.mxu0 %v175
    %356 = vmatpush.msra.mxu0 %v148
    %357 = vmatpush.msra.mxu0 %v121
    %358 = vmatmul.f32.gmra.mxu0 %v320
    %v359 = vpop.f32.mrf.mxu0
    %v360 = vadd.f32 0.0, %v359
    %361 = vdwg.mxu0
    %362 = vmatpush.msra.mxu0 0.0
    %363 = vmatpush.msra.mxu0 0.0
    %364 = vmatpush.msra.mxu0 0.0
    %365 = vmatpush.msra.mxu0 0.0
    %366 = vmatpush.msra.mxu0 0.0
    %367 = vmatpush.msra.mxu0 0.0
    %368 = vmatpush.msra.mxu0 0.0
    %369 = vmatpush.msra.mxu0 %v313
    %370 = vmatpush.msra.mxu0 %v292
    %371 = vmatpush.msra.mxu0 %v271
    %372 = vmatpush.msra.mxu0 %v250
    %373 = vmatpush.msra.mxu0 %v229
    %374 = vmatpush.msra.mxu0 %v208
    %375 = vmatpush.msra.mxu0 %v187
    %376 = vmatpush.msra.mxu0 %v160
    %377 = vmatpush.msra.mxu0 %v133
    %378 = vmatmul.f32.gmra.mxu0 %v320
    %v379 = vpop.f32.mrf.mxu0
    %v380 = vadd.f32 0.0, %v379
    %381 = vdwg.mxu0
    %382 = vmatpush.msra.mxu0 0.0
    %383 = vmatpush.msra.mxu0 0.0
    %384 = vmatpush.msra.mxu0 0.0
    %385 = vmatpush.msra.mxu0 0.0
    %386 = vmatpush.msra.mxu0 0.0
    %387 = vmatpush.msra.mxu0 0.0
    %388 = vmatpush.msra.mxu0 0.0
    %389 = vmatpush.msra.mxu0 %v314
    %390 = vmatpush.msra.mxu0 %v293
    %391 = vmatpush.msra.mxu0 %v272
    %392 = vmatpush.msra.mxu0 %v251
    %393 = vmatpush.msra.mxu0 %v230
    %394 = vmatpush.msra.mxu0 %v209
    %395 = vmatpush.msra.mxu0 %v188
    %396 = vmatpush.msra.mxu0 %v161
    %397 = vmatpush.msra.mxu0 %v134
    %398 = vmatmul.f32.gmra.mxu0 %v320
    %v399 = vpop.f32.mrf.mxu0
    %v400 = vadd.f32 0.0, %v399
    %401 = vdwg.mxu0
    %v402 = vld [vmem:[%s2] sm:$0xff]
    %404 = vset.pattern.permute.xlu0 0
    %405 = vperm.xlu0 %404, %v402
    %v406 = vpop.permute.xlu0 %405
    %v408 = vmul.f32 %v340, %v406
    %v409 = vmul.f32 %v360, %v406
    %v410 = vmul.f32 %v380, %v406
    %v411 = vmul.f32 %v400, %v406
    %v412 = vld [vmem:[%s3] sm:$0xff]
    %414 = vset.pattern.permute.xlu0 0
    %415 = vperm.xlu0 %414, %v412
    %v416 = vpop.permute.xlu0 %415
    %v418 = vadd.f32 %v408, %v416
    %v419 = vadd.f32 %v409, %v416
    %v420 = vadd.f32 %v410, %v416
    %v421 = vadd.f32 %v411, %v416
    %v422 = vmax.f32 %v418, 0.0
    %v423 = vmax.f32 %v419, 0.0
    %v424 = vmax.f32 %v420, 0.0
    %v425 = vmax.f32 %v421, 0.0
    %426 = vst [vmem:[#allocation5] sm:$0xff] %v422
    %427 = vst [vmem:[#allocation5 + $0x8] sm:$0xff] %v423
    %s428 = scalar_lea.vmem [#allocation5], 16
    %429 = vst [vmem:[%s428] sm:$0xff] %v424
    %430 = vst [vmem:[%s428 + $0x8] sm:$0xff] %v425
    // Predicated region
    $region22: #{tpu_custom_call.1} parent=1 // pred_check
      _
    $region23: #{tpu_custom_call.1} parent=1 // pred_check_branch
      %432 = sbr.rel (0) target = $region25
    $region24: #{tpu_custom_call.1} parent=1 // pred_region
      %434 = vsyncadd [#allocation4], 0
      %s435 = sshll.u32 [#allocation5], 4
      %s436 = int_to_ptr.vmem [resolvable:$true] %s435
      %s437 = sshll.u32 %s4, 4
      %s438 = int_to_ptr.hbm [resolvable:$true] %s437
      %443 = dma.vmem_to_hbm [thread:$0]  %s436, 512, %s438, [#allocation4], 256, 256, 16
    $region25: #{tpu_custom_call.1} parent=1 // pred_fallthru
      _
    // Predicated region
    $region26: #{tpu_custom_call.1} parent=1 // pred_check
      _
    $region27: #{tpu_custom_call.1} parent=1 // pred_check_branch
      %445 = sbr.rel (0) target = $region29
    $region28: #{tpu_custom_call.1} parent=1 // pred_region
      %447 = dma.done [#allocation4], 512
    $region29: #{tpu_custom_call.1} parent=1 // pred_fallthru
      _
    %448 = vsyncpa [#allocation3], 1
    %449 = vsyncpa [#allocation4], 1

</llo_original>
